<compile_context>
chip_gen: v6e
topology: v6e:2x2x1
jax: 0.10.0
libtpu: 0.0.40
codegen_flags: <defaults>
</compile_context>

<pallas_src>
import math

import jax
import jax.numpy as jnp
from jax.experimental import pallas as pl
from jax.experimental.pallas import tpu as pltpu

_VMEM_LIMIT = 32 * 1024 * 1024  # safe on v5e/v6e (128 MiB) and v7x (64 MiB)


# --------------------------------------------------------------------------
# tiling helpers
# --------------------------------------------------------------------------
def _largest_divisor_leq(n, cap):
    d = min(n, cap)
    while d > 1:
        if n % d == 0:
            return d
        d -= 1
    return 1


def _pick_batch_block(b, cap=64):
    if b % 8 == 0:
        d = min(b, cap)
        d -= d % 8
        while d >= 8:
            if b % d == 0:
                return d
            d -= 8
    return b  # small / non-8-aligned batch: use full batch as one block


def _pick_row_block(n, cap=512):
    if n <= cap:
        return n
    d = (cap // 8) * 8
    while d >= 8:
        if n % d == 0:
            return d
        d -= 8
    return n


# --------------------------------------------------------------------------
# Pallas kernels
# --------------------------------------------------------------------------
def _input_proj_kernel(x_ref, w_ref, b_ref, out_ref):
    """out = x @ W + b on a row tile. W is the fused (Din, 3H) gate matrix."""
    out_ref[...] = (
        jnp.dot(x_ref[...], w_ref[...], preferred_element_type=jnp.float32)
        + b_ref[...]
    )


def _gru_steps(xp_ref, h, whh, bhh, hdim):
    """Statically-unrolled GRU steps over one time chunk.

    xp_ref: (Tc, Bc, 3H) precomputed input projection (includes bih)
    h:      (Bc, H)      carried hidden state (f32 value)
    whh:    (H, 3H)      fused recurrent weights (already loaded)
    bhh:    (1, 3H)      recurrent bias (already loaded)
    """
    hs = []
    tc = xp_ref.shape[0]
    for t in range(tc):                       # static unroll: LLO visibility
        gi = xp_ref[t]                                        # (Bc, 3H)
        gh = jnp.dot(h, whh, preferred_element_type=jnp.float32) + bhh
        r = jax.nn.sigmoid(gi[:, 0:hdim] + gh[:, 0:hdim])
        z = jax.nn.sigmoid(gi[:, hdim:2 * hdim] + gh[:, hdim:2 * hdim])
        n = jnp.tanh(gi[:, 2 * hdim:3 * hdim] + r * gh[:, 2 * hdim:3 * hdim])
        h = (1.0 - z) * n + z * h
        hs.append(h)
    return hs, h


def _gru_recur_kernel(xp_ref, h0_ref, whh_ref, bhh_ref, out_ref, hN_ref, h_sc):
    """GRU recurrence for one (batch block, time chunk) grid point."""
    @pl.when(pl.program_id(1) == 0)
    def _():
        h_sc[...] = h0_ref[...]

    whh = whh_ref[...]                      # hoisted, loop-invariant
    bhh = bhh_ref[...]
    hdim = h_sc.shape[-1]

    hs, h = _gru_steps(xp_ref, h_sc[...], whh, bhh, hdim)
    for t, ht in enumerate(hs):
        out_ref[t] = ht
    h_sc[...] = h

    @pl.when(pl.program_id(1) == pl.num_programs(1) - 1)
    def _():
        hN_ref[...] = h


def _gru_recur_mlp_kernel(xp_ref, h0_ref, whh_ref, bhh_ref,
                          w1_ref, b1_ref, w2_ref, b2_ref,
                          mean_ref, hN_ref, h_sc):
    """Last GRU layer fused with mean = relu(h @ W1 + b1) @ W2 + b2."""
    @pl.when(pl.program_id(1) == 0)
    def _():
        h_sc[...] = h0_ref[...]

    whh = whh_ref[...]
    bhh = bhh_ref[...]
    hdim = h_sc.shape[-1]

    hs, h = _gru_steps(xp_ref, h_sc[...], whh, bhh, hdim)
    h_sc[...] = h

    tc, bc = xp_ref.shape[0], xp_ref.shape[1]
    seq = jnp.concatenate(hs, axis=0)                         # (Tc*Bc, H)
    m = jnp.dot(seq, w1_ref[...], preferred_element_type=jnp.float32) + b1_ref[...]
    m = jnp.maximum(m, 0.0)
    m = jnp.dot(m, w2_ref[...], preferred_element_type=jnp.float32) + b2_ref[...]
    mean_ref[...] = m.reshape(tc, bc, -1)

    @pl.when(pl.program_id(1) == pl.num_programs(1) - 1)
    def _():
        hN_ref[...] = h


# --------------------------------------------------------------------------
# pallas_call wrappers
# --------------------------------------------------------------------------
def gru_input_projection(x2d, wih, bih, *, row_cap=512):
    n, din = x2d.shape
    g = wih.shape[1]
    rb = _pick_row_block(n, row_cap)
    grid = (n // rb,)
    return pl.pallas_call(
        _input_proj_kernel,
        out_shape=jax.ShapeDtypeStruct((n, g), jnp.float32),
        grid=grid,
        in_specs=[
            pl.BlockSpec((rb, din), lambda i: (i, 0)),
            pl.BlockSpec((din, g), lambda i: (0, 0)),   # weights stay resident
            pl.BlockSpec((1, g), lambda i: (0, 0)),
        ],
        out_specs=pl.BlockSpec((rb, g), lambda i: (i, 0)),
        compiler_params=pltpu.CompilerParams(
            dimension_semantics=("parallel",),
            vmem_limit_bytes=_VMEM_LIMIT),
        cost_estimate=pl.CostEstimate(
            flops=2 * n * din * g,
            transcendentals=0,
            bytes_accessed=4 * (n * din + din * g + g + n * g)),
    )(x2d, wih, bih)


def gru_recurrence(xproj, h0, whh, bhh, *, time_cap=32, batch_cap=64):
    t, b, g = xproj.shape
    h = h0.shape[-1]
    tc = _largest_divisor_leq(t, time_cap)
    bc = _pick_batch_block(b, batch_cap)
    grid = (b // bc, t // tc)
    out, h_n = pl.pallas_call(
        _gru_recur_kernel,
        out_shape=(jax.ShapeDtypeStruct((t, b, h), jnp.float32),
                   jax.ShapeDtypeStruct((b, h), jnp.float32)),
        grid=grid,
        in_specs=[
            pl.BlockSpec((tc, bc, g), lambda bi, ci: (ci, bi, 0)),
            pl.BlockSpec((bc, h), lambda bi, ci: (bi, 0)),
            pl.BlockSpec((h, g), lambda bi, ci: (0, 0)),
            pl.BlockSpec((1, g), lambda bi, ci: (0, 0)),
        ],
        out_specs=(
            pl.BlockSpec((tc, bc, h), lambda bi, ci: (ci, bi, 0)),
            pl.BlockSpec((bc, h), lambda bi, ci: (bi, 0)),
        ),
        scratch_shapes=[pltpu.VMEM((bc, h), jnp.float32)],
        compiler_params=pltpu.CompilerParams(
            dimension_semantics=("parallel", "arbitrary"),
            vmem_limit_bytes=_VMEM_LIMIT),
        cost_estimate=pl.CostEstimate(
            flops=2 * t * b * h * g + 10 * t * b * h,
            transcendentals=3 * t * b * h,
            bytes_accessed=4 * (t * b * g + t * b * h + h * g + g + 3 * b * h)),
    )(xproj, h0, whh, bhh)
    return out, h_n


def gru_recurrence_with_mlp(xproj, h0, whh, bhh, w1, b1, w2, b2,
                            *, time_cap=32, batch_cap=64):
    t, b, g = xproj.shape
    h = h0.shape[-1]
    obs = w2.shape[1]
    tc = _largest_divisor_leq(t, time_cap)
    bc = _pick_batch_block(b, batch_cap)
    grid = (b // bc, t // tc)
    mean, h_n = pl.pallas_call(
        _gru_recur_mlp_kernel,
        out_shape=(jax.ShapeDtypeStruct((t, b, obs), jnp.float32),
                   jax.ShapeDtypeStruct((b, h), jnp.float32)),
        grid=grid,
        in_specs=[
            pl.BlockSpec((tc, bc, g), lambda bi, ci: (ci, bi, 0)),
            pl.BlockSpec((bc, h), lambda bi, ci: (bi, 0)),
            pl.BlockSpec((h, g), lambda bi, ci: (0, 0)),
            pl.BlockSpec((1, g), lambda bi, ci: (0, 0)),
            pl.BlockSpec((h, h), lambda bi, ci: (0, 0)),
            pl.BlockSpec((1, h), lambda bi, ci: (0, 0)),
            pl.BlockSpec((h, obs), lambda bi, ci: (0, 0)),
            pl.BlockSpec((1, obs), lambda bi, ci: (0, 0)),
        ],
        out_specs=(
            pl.BlockSpec((tc, bc, obs), lambda bi, ci: (ci, bi, 0)),
            pl.BlockSpec((bc, h), lambda bi, ci: (bi, 0)),
        ),
        scratch_shapes=[pltpu.VMEM((bc, h), jnp.float32)],
        compiler_params=pltpu.CompilerParams(
            dimension_semantics=("parallel", "arbitrary"),
            vmem_limit_bytes=_VMEM_LIMIT),
        cost_estimate=pl.CostEstimate(
            flops=(2 * t * b * h * g + 10 * t * b * h
                   + 2 * t * b * h * h + 2 * t * b * h * obs),
            transcendentals=3 * t * b * h,
            bytes_accessed=4 * (t * b * g + t * b * obs + h * g + g
                                + h * h + h * obs + 3 * b * h)),
    )(xproj, h0, whh, bhh, w1, b1, w2, b2)
    return mean, h_n


# --------------------------------------------------------------------------
# CoreRNN params + forward
# --------------------------------------------------------------------------
def init_core_rnn_params(key, input_dim, hidden_size, depth, observation_dim):
    params = {"gru": [], "depth": depth, "hidden_size": hidden_size,
              "observation_dim": observation_dim}
    bound = 1.0 / math.sqrt(hidden_size)
    for layer in range(depth):
        din = input_dim if layer == 0 else hidden_size
        key, k1, k2, k3, k4 = jax.random.split(key, 5)
        wih = jax.random.uniform(k1, (din, 3 * hidden_size), jnp.float32, -bound, bound)
        whh = jax.random.uniform(k2, (hidden_size, 3 * hidden_size), jnp.float32, -bound, bound)
        bih = jax.random.uniform(k3, (1, 3 * hidden_size), jnp.float32, -bound, bound)
        bhh = jax.random.uniform(k4, (1, 3 * hidden_size), jnp.float32, -bound, bound)
        params["gru"].append((wih, whh, bih, bhh))
    key, k1, k2, k3, k4 = jax.random.split(key, 5)
    b1 = 1.0 / math.sqrt(hidden_size)
    params["w1"] = jax.random.uniform(k1, (hidden_size, hidden_size), jnp.float32, -b1, b1)
    params["b1"] = jax.random.uniform(k2, (1, hidden_size), jnp.float32, -b1, b1)
    params["w2"] = jax.random.uniform(k3, (hidden_size, observation_dim), jnp.float32, -b1, b1)
    params["b2"] = jax.random.uniform(k4, (1, observation_dim), jnp.float32, -b1, b1)
    return params


def core_rnn_forward(params, input_seq, hidden=None, *, time_cap=32):
    """input_seq: (T, B, input_dim) -> (mean (T, B, obs_dim), hidden (depth, B, H))."""
    T, B, _ = input_seq.shape
    depth = params["depth"]
    H = params["hidden_size"]
    if hidden is None:
        hidden = jnp.zeros((depth, B, H), jnp.float32)

    x = input_seq
    finals = []
    mean = None
    for layer in range(depth):
        wih, whh, bih, bhh = params["gru"][layer]
        din = x.shape[-1]
        # Hoisted, MXU-friendly input projection over all (T*B) rows at once.
        xproj = gru_input_projection(x.reshape(T * B, din), wih, bih)
        xproj = xproj.reshape(T, B, 3 * H)
        if layer == depth - 1:
            mean, h_n = gru_recurrence_with_mlp(
                xproj, hidden[layer], whh, bhh,
                params["w1"], params["b1"], params["w2"], params["b2"],
                time_cap=time_cap)
        else:
            x, h_n = gru_recurrence(xproj, hidden[layer], whh, bhh, time_cap=time_cap)
        finals.append(h_n)
    hidden_out = jnp.stack(finals, axis=0)
    return mean, hidden_out


# --------------------------------------------------------------------------
# Pure-JAX reference (sanity check only)
# --------------------------------------------------------------------------
def _ref_forward(params, input_seq, hidden=None):
    T, B, _ = input_seq.shape
    depth = params["depth"]
    H = params["hidden_size"]
    if hidden is None:
        hidden = jnp.zeros((depth, B, H), jnp.float32)
    x = input_seq
    finals = []
    for layer in range(depth):
        wih, whh, bih, bhh = params["gru"][layer]
        h = hidden[layer]
        outs = []
        for t in range(T):
            gi = x[t] @ wih + bih
            gh = h @ whh + bhh
            r = jax.nn.sigmoid(gi[:, :H] + gh[:, :H])
            z = jax.nn.sigmoid(gi[:, H:2 * H] + gh[:, H:2 * H])
            n = jnp.tanh(gi[:, 2 * H:] + r * gh[:, 2 * H:])
            h = (1.0 - z) * n + z * h
            outs.append(h)
        x = jnp.stack(outs, axis=0)
        finals.append(h)
    hid = jnp.stack(finals, axis=0)
    hmid = jnp.maximum(x @ params["w1"] + params["b1"], 0.0)
    mean = hmid @ params["w2"] + params["b2"]
    return mean, hid


if __name__ == "__main__":
    # Small shapes: seq=8, batch=2, input_dim=16, hidden=32, depth=2, obs=16.
    T, B, D_IN, H, DEPTH, OBS = 8, 2, 16, 32, 2, 16

    key = jax.random.PRNGKey(0)
    key, pkey, xkey, hkey = jax.random.split(key, 4)
    params = init_core_rnn_params(pkey, D_IN, H, DEPTH, OBS)
    input_seq = jax.random.normal(xkey, (T, B, D_IN), jnp.float32)
    h0 = 0.1 * jax.random.normal(hkey, (DEPTH, B, H), jnp.float32)

    # time_cap=4 -> 2 time chunks, exercising the gridded hidden-state carry.
    mean, hidden = core_rnn_forward(params, input_seq, h0, time_cap=4)
    jax.block_until_ready((mean, hidden))

    mean_ref, hidden_ref = _ref_forward(params, input_seq, h0)
    assert mean.shape == (T, B, OBS) and hidden.shape == (DEPTH, B, H)
    assert jnp.allclose(mean, mean_ref, rtol=1e-4, atol=1e-4)
    assert jnp.allclose(hidden, hidden_ref, rtol=1e-4, atol=1e-4)

    print("KERNEL_OK")
</pallas_src>

<mosaic_0001>
module attributes {stable_mosaic.version = 11 : i64} {
  func.func @_input_proj_kernel(%arg0: i32, %arg1: memref<16x16xf32, #tpu.memory_space<vmem>>, %arg2: memref<16x96xf32, #tpu.memory_space<vmem>>, %arg3: memref<1x96xf32, #tpu.memory_space<vmem>>, %arg4: memref<16x96xf32, #tpu.memory_space<vmem>>) attributes {dimension_semantics = [#tpu.dimension_semantics<parallel>], iteration_bounds = array<i64: 1>, scalar_prefetch = 0 : i64, scratch_operands = 0 : i64, tpu.core_type = #tpu.core_type<tc>, window_params = [{transform_indices = @transform_0, window_bounds = array<i64: 16, 16>}, {pipeline_mode = #tpu.pipeline_mode<synchronous>, transform_indices = @transform_1, window_bounds = array<i64: 16, 96>}, {pipeline_mode = #tpu.pipeline_mode<synchronous>, transform_indices = @transform_2, window_bounds = array<i64: 1, 96>}, {transform_indices = @transform_3, window_bounds = array<i64: 16, 96>}]} {
    %c0 = arith.constant 0 : index
    %c0_0 = arith.constant 0 : index
    %0 = vector.load %arg1[%c0, %c0_0] : memref<16x16xf32, #tpu.memory_space<vmem>>, vector<16x16xf32>
    %c0_1 = arith.constant 0 : index
    %c0_2 = arith.constant 0 : index
    %1 = vector.load %arg2[%c0_1, %c0_2] : memref<16x96xf32, #tpu.memory_space<vmem>>, vector<16x96xf32>
    %cst = arith.constant dense<0.000000e+00> : vector<16x96xf32>
    %2 = tpu.matmul %0, %1, %cst {dimension_numbers = #tpu.dot_dimension_numbers<[1], [0], [0], [1], [0, 0, 1, 1], [], []>} : vector<16x16xf32>, vector<16x96xf32>, vector<16x96xf32> -> vector<16x96xf32>
    %c0_3 = arith.constant 0 : index
    %c0_4 = arith.constant 0 : index
    %3 = vector.load %arg3[%c0_3, %c0_4] : memref<1x96xf32, #tpu.memory_space<vmem>>, vector<1x96xf32>
    %4 = vector.broadcast %3 : vector<1x96xf32> to vector<16x96xf32>
    %5 = arith.addf %2, %4 : vector<16x96xf32>
    %c0_5 = arith.constant 0 : index
    %c0_6 = arith.constant 0 : index
    %6 = vector.load %arg4[%c0_5, %c0_6] : memref<16x96xf32, #tpu.memory_space<vmem>>, vector<16x96xf32>
    tpu.vector_store %arg4[%c0_5, %c0_6], %5 {strides = array<i32>} : memref<16x96xf32, #tpu.memory_space<vmem>>, vector<16x96xf32>,
    return
  }
  func.func @transform_0(%arg0: i32) -> (i32, i32) {
    %c0_i32 = arith.constant 0 : i32
    %c0_i32_0 = arith.constant 0 : i32
    return %arg0, %c0_i32 : i32, i32
  }
  func.func @transform_1(%arg0: i32) -> (i32, i32) {
    %c0_i32 = arith.constant 0 : i32
    %c0_i32_0 = arith.constant 0 : i32
    %c0_i32_1 = arith.constant 0 : i32
    return %c0_i32, %c0_i32_0 : i32, i32
  }
  func.func @transform_2(%arg0: i32) -> (i32, i32) {
    %c0_i32 = arith.constant 0 : i32
    %c0_i32_0 = arith.constant 0 : i32
    %c0_i32_1 = arith.constant 0 : i32
    return %c0_i32, %c0_i32_0 : i32, i32
  }
  func.func @transform_3(%arg0: i32) -> (i32, i32) {
    %c0_i32 = arith.constant 0 : i32
    %c0_i32_0 = arith.constant 0 : i32
    return %arg0, %c0_i32 : i32, i32
  }
}

</mosaic_0001>

<llo_original>
// kernel: tpu_custom_call.1
$region0: #{tpu_custom_call.1}
  #allocation0 [shape = 'u32[]', space=smem, size = 0x4, offset = 0x4, fixed_abs, tag = 'smem constant byte address 0x4 - core index']
  #allocation1 [shape = 'u32[144,128]{1,0:T(1,128)}', space=vmem, size = 0x12000, scoped, tag = 'internal scratch']
  %s0 = inlined_call_operand.hbm [shape: f32[16,16], index: 0, kind: input, shape index: {}]
  %s1 = inlined_call_operand.hbm [shape: f32[16,96], index: 1, kind: input, shape index: {}]
  %s2 = inlined_call_operand.vmem [shape: f32[1,96], index: 2, kind: input, shape index: {}]
  %s3 = inlined_call_operand.hbm [shape: f32[16,96], index: 3, kind: output, shape index: {}]
  %s4 = sld [smem:[#allocation0]]
  $region30: #{tpu_custom_call.1} parent=0
    _
  %s6 = ssub.s32 1, %s4
  %s7 = scalar_select 0, %s6, %s4
  $region1: #{tpu_custom_call.1} parent=0
    #allocation2 [shape = 'u8[8192]{0}', space=vmem, size = 0x2000, scoped, tag = 'input window, operand 0, single buffered']
    #allocation3 [shape = 's32[1]{0}', space=sflag, size = 0x4, scoped, tag = 'scoped memory for tpu_custom_call.1']
    #allocation4 [shape = 's32[1]{0}', space=sflag, size = 0x4, scoped, tag = 'scoped memory for tpu_custom_call.1']
    #allocation5 [shape = 'u8[8192]{0}', space=vmem, size = 0x2000, scoped, tag = 'input window, operand 1, single buffered']
    #allocation6 [shape = 's32[1]{0}', space=sflag, size = 0x4, scoped, tag = 'scoped memory for tpu_custom_call.1']
    #allocation7 [shape = 'u8[8192]{0}', space=vmem, size = 0x2000, scoped, tag = 'output window, operand 0, single buffered']
    %8 = vsyncpa [#allocation3], 0
    %9 = vsyncpa [#allocation6], 0
    %10 = vsyncpa [#allocation4], 0
    // Predicated region
    $region2: #{tpu_custom_call.1} parent=1 // pred_check
      _
    $region3: #{tpu_custom_call.1} parent=1 // pred_check_branch
      %12 = sbr.rel (0) target = $region5
    $region4: #{tpu_custom_call.1} parent=1 // pred_region
      %s14 = ssub.s32 256, 256
      %15 = vsyncadd [#allocation3], %s14
      %s16 = sshll.u32 [#allocation2], 4
      %s17 = int_to_ptr.vmem [resolvable:$true] %s16
      %22 = dma.hbm_to_vmem [thread:$0]  %s0, 256, %s17, [#allocation3], 128, 128, 8
    $region5: #{tpu_custom_call.1} parent=1 // pred_fallthru
      _
    // Predicated region
    $region6: #{tpu_custom_call.1} parent=1 // pred_check
      _
    $region7: #{tpu_custom_call.1} parent=1 // pred_check_branch
      %24 = sbr.rel (0) target = $region9
    $region8: #{tpu_custom_call.1} parent=1 // pred_region
      %s26 = ssub.s32 256, 256
      %27 = vsyncadd [#allocation6], %s26
      %s28 = sshll.u32 [#allocation5], 4
      %s29 = int_to_ptr.vmem [resolvable:$true] %s28
      %34 = dma.hbm_to_vmem [thread:$0]  %s1, 256, %s29, [#allocation6], 128, 128, 8
    $region9: #{tpu_custom_call.1} parent=1 // pred_fallthru
      _
    // Predicated region
    $region10: #{tpu_custom_call.1} parent=1 // pred_check
      _
    $region11: #{tpu_custom_call.1} parent=1 // pred_check_branch
      %36 = sbr.rel (0) target = $region13
    $region12: #{tpu_custom_call.1} parent=1 // pred_region
      _
    $region13: #{tpu_custom_call.1} parent=1 // pred_fallthru
      _
    // Predicated region
    $region14: #{tpu_custom_call.1} parent=1 // pred_check
      _
    $region15: #{tpu_custom_call.1} parent=1 // pred_check_branch
      %38 = sbr.rel (0) target = $region17
    $region16: #{tpu_custom_call.1} parent=1 // pred_region
      %39 = dma.done [#allocation3], 256
    $region17: #{tpu_custom_call.1} parent=1 // pred_fallthru
      _
    // Predicated region
    $region18: #{tpu_custom_call.1} parent=1 // pred_check
      _
    $region19: #{tpu_custom_call.1} parent=1 // pred_check_branch
      %41 = sbr.rel (0) target = $region21
    $region20: #{tpu_custom_call.1} parent=1 // pred_region
      %42 = dma.done [#allocation6], 256
    $region21: #{tpu_custom_call.1} parent=1 // pred_fallthru
      _
    %v43 = vld [vmem:[#allocation2] sm:$0xff]
    %v44 = vld [vmem:[#allocation2 + $0x8] sm:$0xff]
    %v45 = vld [vmem:[#allocation5] sm:$0xff]
    %v46 = vld [vmem:[#allocation5 + $0x8] sm:$0xff]
    %v47 = vld [vmem:[%s2] sm:$0x1]
    %v49 = vlaneseq
    %v50 = vshrl.u32 %v49, 7
    %v51 = vsub.s32 0, %v50
    %v52 = vrot.slane %v47, %v51
    %vm54 = vcmask 130048
    %v56 = vsel %vm54, %v43, 0
    %v59 = vsel %vm54, %v44, 0
    %61 = vmatprep.subr.mxu0 0.0
    %62 = vmatpush1.msra.mxu0 0.0
    %63 = vmatprep.subr.mxu0 0.0
    %64 = vmatpush1.msra.mxu0 0.0
    %65 = vmatprep.subr.mxu0 0.0
    %66 = vmatpush1.msra.mxu0 0.0
    %67 = vmatprep.subr.mxu0 0.0
    %68 = vmatpush1.msra.mxu0 0.0
    %69 = vmatprep.subr.mxu0 0.0
    %70 = vmatpush1.msra.mxu0 0.0
    %71 = vmatprep.subr.mxu0 0.0
    %72 = vmatpush1.msra.mxu0 0.0
    %73 = vmatprep.subr.mxu0 0.0
    %74 = vmatpush1.msra.mxu0 0.0
    %75 = vmatprep.subr.mxu0 0.0
    %76 = vmatpush1.msra.mxu0 0.0
    %77 = vmatprep.subr.mxu0 0.0
    %78 = vmatpush1.msra.mxu0 0.0
    %79 = vmatprep.subr.mxu0 0.0
    %80 = vmatpush1.msra.mxu0 0.0
    %81 = vmatprep.subr.mxu0 0.0
    %82 = vmatpush1.msra.mxu0 0.0
    %83 = vmatprep.subr.mxu0 0.0
    %84 = vmatpush1.msra.mxu0 0.0
    %85 = vmatprep.subr.mxu0 0.0
    %86 = vmatpush1.msra.mxu0 0.0
    %87 = vmatprep.subr.mxu0 0.0
    %88 = vmatpush1.msra.mxu0 0.0
    %89 = vmatprep.subr.mxu0 0.0
    %90 = vmatpush1.msra.mxu0 %v46
    %91 = vmatprep.subr.mxu0 0.0
    %92 = vmatpush1.msra.mxu0 %v45
    %93 = vmatprep.subr.mxu0 0.0
    %94 = vmatpush2.msra.mxu0 0.0
    %95 = vmatprep.subr.mxu0 0.0
    %96 = vmatpush2.msra.mxu0 0.0
    %97 = vmatprep.subr.mxu0 0.0
    %98 = vmatpush2.msra.mxu0 0.0
    %99 = vmatprep.subr.mxu0 0.0
    %100 = vmatpush2.msra.mxu0 0.0
    %101 = vmatprep.subr.mxu0 0.0
    %102 = vmatpush2.msra.mxu0 0.0
    %103 = vmatprep.subr.mxu0 0.0
    %104 = vmatpush2.msra.mxu0 0.0
    %105 = vmatprep.subr.mxu0 0.0
    %106 = vmatpush2.msra.mxu0 0.0
    %107 = vmatprep.subr.mxu0 0.0
    %108 = vmatpush2.msra.mxu0 0.0
    %109 = vmatprep.subr.mxu0 0.0
    %110 = vmatpush2.msra.mxu0 0.0
    %111 = vmatprep.subr.mxu0 0.0
    %112 = vmatpush2.msra.mxu0 0.0
    %113 = vmatprep.subr.mxu0 0.0
    %114 = vmatpush2.msra.mxu0 0.0
    %115 = vmatprep.subr.mxu0 0.0
    %116 = vmatpush2.msra.mxu0 0.0
    %117 = vmatprep.subr.mxu0 0.0
    %118 = vmatpush2.msra.mxu0 0.0
    %119 = vmatprep.subr.mxu0 0.0
    %120 = vmatpush2.msra.mxu0 0.0
    %121 = vmatprep.subr.mxu0 0.0
    %122 = vmatpush2.msra.mxu0 0.0
    %123 = vmatprep.subr.mxu0 0.0
    %124 = vmatpush2.msra.mxu0 0.0
    %125 = vmatprep.mubr.f32.mxu0 0.0
    %126 = vmatmul.mubr.f32.gmra.mxu0 %v56
    %v127 = vpop.f32.mrf.mxu0
    %v128 = vadd.f32 %v52, %v127
    %v129 = vpop.f32.mrf.mxu0
    %130 = vmatprep.mubr.f32.mxu0 0.0
    %131 = vmatmul.mubr.f32.gmra.mxu0 %v59
    %v132 = vpop.f32.mrf.mxu0
    %v133 = vadd.f32 %v52, %v132
    %v134 = vpop.f32.mrf.mxu0
    %135 = vdwg.mxu0
    %vm136 = vcmask 785408
    %137 = vst.msk [vmem:[#allocation7] sm:$0xff] %vm136, %v128
    %138 = vst.msk [vmem:[#allocation7 + $0x8] sm:$0xff] %vm136, %v133
    // Predicated region
    $region22: #{tpu_custom_call.1} parent=1 // pred_check
      _
    $region23: #{tpu_custom_call.1} parent=1 // pred_check_branch
      %140 = sbr.rel (0) target = $region25
    $region24: #{tpu_custom_call.1} parent=1 // pred_region
      %s142 = ssub.s32 256, 256
      %143 = vsyncadd [#allocation4], %s142
      %s144 = sshll.u32 [#allocation7], 4
      %s145 = int_to_ptr.vmem [resolvable:$true] %s144
      %150 = dma.vmem_to_hbm [thread:$0]  %s145, 256, %s3, [#allocation4], 128, 128, 8
    $region25: #{tpu_custom_call.1} parent=1 // pred_fallthru
      _
    // Predicated region
    $region26: #{tpu_custom_call.1} parent=1 // pred_check
      _
    $region27: #{tpu_custom_call.1} parent=1 // pred_check_branch
      %152 = sbr.rel (0) target = $region29
    $region28: #{tpu_custom_call.1} parent=1 // pred_region
      %153 = dma.done [#allocation4], 256
    $region29: #{tpu_custom_call.1} parent=1 // pred_fallthru
      _
    %154 = vsyncpa [#allocation3], 1
    %155 = vsyncpa [#allocation6], 1
    %156 = vsyncpa [#allocation4], 1

</llo_original>
